<compile_context>
chip_gen: v5e
topology: v5e:2x2
jax: 0.10.0
libtpu: 0.0.40
codegen_flags: <defaults>
</compile_context>

<pallas_src>
import jax
import jax.numpy as jnp
from jax.experimental import pallas as pl
from jax.experimental.pallas import tpu as pltpu

MAX_LENGTH = 20
LANE = 128  # TPU lane width; all packed slabs are padded to this in the last dim.


# ----------------------------------------------------------------------------
# parameter init (mimics PyTorch module shapes/defaults)
# ----------------------------------------------------------------------------
def init_params(key, hidden_size, output_size, max_length=MAX_LENGTH):
    H, V, L = hidden_size, output_size, max_length
    ks = jax.random.split(key, 12)

    def unif(k, shape, fan_in):
        b = 1.0 / jnp.sqrt(fan_in)
        return jax.random.uniform(k, shape, jnp.float32, -b, b)

    return {
        "embedding": jax.random.normal(ks[0], (V, H), jnp.float32),
        "attn_w": unif(ks[1], (L, 2 * H), 2 * H),       # nn.Linear(2H, L).weight
        "attn_b": unif(ks[2], (L,), 2 * H),
        "comb_w": unif(ks[3], (H, 2 * H), 2 * H),       # nn.Linear(2H, H).weight
        "comb_b": unif(ks[4], (H,), 2 * H),
        "gru_w_ih": unif(ks[5], (3 * H, H), H),          # nn.GRU weight_ih_l0 (r,z,n)
        "gru_w_hh": unif(ks[6], (3 * H, H), H),
        "gru_b_ih": unif(ks[7], (3 * H,), H),
        "gru_b_hh": unif(ks[8], (3 * H,), H),
        "out_w": unif(ks[9], (V, H), H),                 # nn.Linear(H, V).weight
        "out_b": unif(ks[10], (V,), H),
    }


# ----------------------------------------------------------------------------
# one-time host-side packing (no per-step transposes / reshapes)
# ----------------------------------------------------------------------------
def prepare_params(params, max_length=MAX_LENGTH):
    H = params["comb_w"].shape[0]
    V = params["out_w"].shape[0]
    L = max_length
    hoff = ((L + 7) // 8) * 8          # aligned start of the H-wide column sections
    assert L <= LANE and V <= LANE and 3 * H <= LANE and hoff + 3 * H <= LANE

    f32 = jnp.float32
    wa = params["attn_w"].astype(f32)        # [L, 2H]
    wc = params["comb_w"].astype(f32)        # [H, 2H]
    wih = params["gru_w_ih"].astype(f32)     # [3H, H]
    whh = params["gru_w_hh"].astype(f32)     # [3H, H]
    wo = params["out_w"].astype(f32)         # [V, H]

    # emb @ [attn_e | comb_e]
    w_emb = jnp.zeros((H, LANE), f32)
    w_emb = w_emb.at[:, :L].set(wa[:, :H].T)
    w_emb = w_emb.at[:, hoff:hoff + H].set(wc[:, :H].T)

    # hid @ [attn_h | W_hh(r,z,n)]
    w_hid = jnp.zeros((H, LANE), f32)
    w_hid = w_hid.at[:, :L].set(wa[:, H:].T)
    w_hid = w_hid.at[:, hoff:hoff + 3 * H].set(whh.T)

    # x @ W_ih(r,z,n)
    w_ih = jnp.zeros((H, LANE), f32)
    w_ih = w_ih.at[:, :3 * H].set(wih.T)

    # attn_applied @ comb_a
    w_ca = wc[:, H:].T                        # [H, H]

    # new_h @ W_out
    w_out = jnp.zeros((H, LANE), f32)
    w_out = w_out.at[:, :V].set(wo.T)

    # bias slab: row0 -> added to emb@w_emb, row1 -> hid@w_hid, row2 -> x@w_ih,
    # row3 -> new_h@w_out.
    b = jnp.zeros((8, LANE), f32)
    b = b.at[0, hoff:hoff + H].set(params["comb_b"].astype(f32))
    b = b.at[1, :L].set(params["attn_b"].astype(f32))
    b = b.at[1, hoff:hoff + 3 * H].set(params["gru_b_hh"].astype(f32))
    b = b.at[2, :3 * H].set(params["gru_b_ih"].astype(f32))
    b = b.at[3, :V].set(params["out_b"].astype(f32))

    # [V, 1, H]: leading axis is the gather axis; last two dims are the block.
    emb_tab = params["embedding"].astype(f32).reshape(V, 1, H)

    return {
        "emb_tab": emb_tab, "w_emb": w_emb, "w_hid": w_hid, "w_ih": w_ih,
        "w_ca": w_ca, "w_out": w_out, "b": b,
        "H": H, "V": V, "L": L, "hoff": hoff,
    }


# ----------------------------------------------------------------------------
# in-kernel single decoder step (all operands are jnp values in VMEM)
# ----------------------------------------------------------------------------
def _decode_step(emb, hid, enc, w_emb, w_hid, w_ih, w_ca, w_out, b, *, H, V, L, hoff):
    f32 = jnp.float32
    col = jax.lax.broadcasted_iota(jnp.int32, (1, LANE), 1)
    neg = jnp.float32(-1e30)

    # fused matmuls (biases folded into the packed bias rows)
    r1 = jnp.dot(emb, w_emb, preferred_element_type=f32) + b[0:1, :]   # attn_e | comb_e
    r2 = jnp.dot(hid, w_hid, preferred_element_type=f32) + b[1:2, :]   # attn_h | h_r h_z h_n

    # attention softmax over the first L lanes
    att = jnp.where(col < L, r1 + r2, neg)
    m = jnp.max(att, axis=1, keepdims=True)
    e = jnp.exp(att - m)
    attn_w = e * pl.reciprocal(jnp.sum(e, axis=1, keepdims=True), approx=True)  # [1,128]

    # attn_applied = attn_w @ encoder_outputs (enc zero-padded to [128, H])
    attn_applied = jnp.dot(attn_w, enc, preferred_element_type=f32)             # [1, H]

    # output = relu(attn_combine(cat(emb, attn_applied)))
    comb = r1[:, hoff:hoff + H] + jnp.dot(attn_applied, w_ca, preferred_element_type=f32)
    x = jnp.maximum(comb, 0.0)

    # GRU cell (PyTorch gate order r, z, n)
    gi = jnp.dot(x, w_ih, preferred_element_type=f32) + b[2:3, :]
    i_r, i_z, i_n = gi[:, :H], gi[:, H:2 * H], gi[:, 2 * H:3 * H]
    h_r = r2[:, hoff:hoff + H]
    h_z = r2[:, hoff + H:hoff + 2 * H]
    h_n = r2[:, hoff + 2 * H:hoff + 3 * H]
    r = jax.nn.sigmoid(i_r + h_r)
    z = jax.nn.sigmoid(i_z + h_z)
    n = jnp.tanh(i_n + r * h_n)
    new_h = (1.0 - z) * n + z * hid                                             # [1, H]

    # log_softmax(out(new_h)) over the first V lanes
    lo = jnp.dot(new_h, w_out, preferred_element_type=f32) + b[3:4, :]
    lo = jnp.where(col < V, lo, neg)
    m2 = jnp.max(lo, axis=1, keepdims=True)
    logp = lo - m2 - jnp.log(jnp.sum(jnp.exp(lo - m2), axis=1, keepdims=True))  # [1,128]

    return logp, new_h, attn_w


def _pack_out_block(logp, new_h, attn_w, H):
    newh_row = jnp.concatenate([new_h, jnp.zeros((1, LANE - H), jnp.float32)], axis=1)
    return jnp.concatenate(
        [logp, newh_row, attn_w, jnp.zeros((5, LANE), jnp.float32)], axis=0)   # [8,128]


# ----------------------------------------------------------------------------
# one pallas_call for a whole (teacher-forced) token sequence; grid=(T,)
# ----------------------------------------------------------------------------
def _build_seq_call(prepped, seq_len):
    H, V, L, hoff = prepped["H"], prepped["V"], prepped["L"], prepped["hoff"]

    def kernel(toks_ref, h0_ref, emb_ref, enc_ref, w_emb_ref, w_hid_ref,
               w_ih_ref, w_ca_ref, w_out_ref, b_ref, out_ref, h_scr):
        del toks_ref  # tokens are consumed only by the embedding gather index_map
        t = pl.program_id(0)

        @pl.when(t == 0)
        def _():
            h_scr[...] = h0_ref[...]

        emb = emb_ref[0]                         # [1, H] gathered row; dropout == identity
        hid = h_scr[...]
        logp, new_h, attn_w = _decode_step(
            emb, hid, enc_ref[...], w_emb_ref[...], w_hid_ref[...], w_ih_ref[...],
            w_ca_ref[...], w_out_ref[...], b_ref[...], H=H, V=V, L=L, hoff=hoff)
        h_scr[...] = new_h                       # carry hidden across grid steps
        out_ref[0] = _pack_out_block(logp, new_h, attn_w, H)   # one lane-dense store

    const2 = lambda t, toks: (0, 0)              # weights / state stay VMEM-resident
    grid_spec = pltpu.PrefetchScalarGridSpec(
        num_scalar_prefetch=1,                   # tokens prefetched into SMEM
        grid=(seq_len,),
        in_specs=[
            pl.BlockSpec((1, H), const2),                               # h0
            pl.BlockSpec((1, 1, H), lambda t, toks: (toks[t], 0, 0)),   # embedding row gather
            pl.BlockSpec((LANE, H), const2),                            # encoder outputs (padded)
            pl.BlockSpec((H, LANE), const2),                            # w_emb
            pl.BlockSpec((H, LANE), const2),                            # w_hid
            pl.BlockSpec((H, LANE), const2),                            # w_ih
            pl.BlockSpec((H, H), const2),                               # w_ca
            pl.BlockSpec((H, LANE), const2),                            # w_out
            pl.BlockSpec((8, LANE), const2),                            # bias slab
        ],
        out_specs=pl.BlockSpec((1, 8, LANE), lambda t, toks: (t, 0, 0)),
        scratch_shapes=[pltpu.VMEM((1, H), jnp.float32)],               # hidden carry
    )

    call = pl.pallas_call(
        kernel,
        out_shape=jax.ShapeDtypeStruct((seq_len, 8, LANE), jnp.float32),
        grid_spec=grid_spec,
        compiler_params=pltpu.CompilerParams(dimension_semantics=("arbitrary",)),
    )

    def run(tokens, hidden0, encoder_outputs):
        toks = tokens.astype(jnp.int32)
        h0 = hidden0.reshape(1, H).astype(jnp.float32)
        enc = jnp.zeros((LANE, H), jnp.float32).at[:L].set(
            encoder_outputs.astype(jnp.float32))
        return call(toks, h0, prepped["emb_tab"], enc,
                    prepped["w_emb"], prepped["w_hid"], prepped["w_ih"],
                    prepped["w_ca"], prepped["w_out"], prepped["b"])

    return run


# ----------------------------------------------------------------------------
# single-step decoder (matches the PyTorch module's forward exactly)
# ----------------------------------------------------------------------------
def make_attn_decoder(prepped):
    H, V, L = prepped["H"], prepped["V"], prepped["L"]
    run = _build_seq_call(prepped, 1)

    @jax.jit
    def forward(token, hidden, encoder_outputs):
        tok = jnp.asarray(token, jnp.int32).reshape(1)
        out = run(tok, hidden, encoder_outputs)
        logp = out[0, 0:1, :V]
        new_h = out[0, 1:2, :H].reshape(1, 1, H)
        attn_w = out[0, 2:3, :L]
        return logp, new_h, attn_w

    return forward


# ----------------------------------------------------------------------------
# fused multi-step decoder: whole teacher-forced sequence in ONE pallas_call
# ----------------------------------------------------------------------------
def make_attn_decoder_seq(prepped, seq_len):
    H, V, L = prepped["H"], prepped["V"], prepped["L"]
    run = _build_seq_call(prepped, seq_len)

    @jax.jit
    def decode(tokens, hidden0, encoder_outputs):
        out = run(tokens, hidden0, encoder_outputs)
        logp_all = out[:, 0, :V]      # [T, V]  per-step log-probs
        hid_all = out[:, 1, :H]       # [T, H]  per-step hidden states
        attw_all = out[:, 2, :L]      # [T, L]  per-step attention weights
        return logp_all, hid_all, attw_all

    return decode


# ----------------------------------------------------------------------------
# pure-JAX reference (matches the PyTorch forward, eval-mode dropout)
# ----------------------------------------------------------------------------
def attn_decoder_reference(params, token, hidden, encoder_outputs):
    H = hidden.shape[-1]
    emb = params["embedding"][token].reshape(1, H)
    hid = hidden.reshape(1, H)
    cat1 = jnp.concatenate([emb, hid], axis=1)
    attn_w = jax.nn.softmax(cat1 @ params["attn_w"].T + params["attn_b"], axis=1)
    attn_applied = attn_w @ encoder_outputs
    cat2 = jnp.concatenate([emb, attn_applied], axis=1)
    x = jnp.maximum(cat2 @ params["comb_w"].T + params["comb_b"], 0.0)
    gi = x @ params["gru_w_ih"].T + params["gru_b_ih"]
    gh = hid @ params["gru_w_hh"].T + params["gru_b_hh"]
    i_r, i_z, i_n = gi[:, :H], gi[:, H:2 * H], gi[:, 2 * H:]
    h_r, h_z, h_n = gh[:, :H], gh[:, H:2 * H], gh[:, 2 * H:]
    r = jax.nn.sigmoid(i_r + h_r)
    z = jax.nn.sigmoid(i_z + h_z)
    n = jnp.tanh(i_n + r * h_n)
    new_h = (1.0 - z) * n + z * hid
    logits = new_h @ params["out_w"].T + params["out_b"]
    logp = jax.nn.log_softmax(logits, axis=1)
    return logp, new_h.reshape(1, 1, H), attn_w


def reference_decode_seq(params, tokens, hidden0, encoder_outputs):
    logs, hids, atts = [], [], []
    h = hidden0
    for i in range(tokens.shape[0]):
        lp, h, aw = attn_decoder_reference(params, int(tokens[i]), h, encoder_outputs)
        logs.append(lp)
        hids.append(h.reshape(1, -1))
        atts.append(aw)
    return (jnp.concatenate(logs, 0), jnp.concatenate(hids, 0),
            jnp.concatenate(atts, 0))


# ----------------------------------------------------------------------------
if __name__ == "__main__":
    HIDDEN = 32
    VOCAB = 48
    L = MAX_LENGTH
    T = 6

    key = jax.random.PRNGKey(0)
    kp, kh, ke, kt = jax.random.split(key, 4)
    params = init_params(kp, HIDDEN, VOCAB, L)
    prepped = prepare_params(params, L)

    hidden = jax.random.normal(kh, (1, 1, HIDDEN), jnp.float32)
    encoder_outputs = jax.random.normal(ke, (L, HIDDEN), jnp.float32)

    # --- single decoder step (module forward) ---
    forward = make_attn_decoder(prepped)
    token = jnp.int32(7)
    logp, new_h, attn_w = forward(token, hidden, encoder_outputs)
    jax.block_until_ready((logp, new_h, attn_w))

    r_logp, r_h, r_aw = attn_decoder_reference(params, 7, hidden, encoder_outputs)
    assert logp.shape == (1, VOCAB) and new_h.shape == (1, 1, HIDDEN) and attn_w.shape == (1, L)
    assert jnp.allclose(logp, r_logp, atol=2e-3, rtol=2e-3)
    assert jnp.allclose(new_h, r_h, atol=2e-3, rtol=2e-3)
    assert jnp.allclose(attn_w, r_aw, atol=2e-3, rtol=2e-3)

    # --- fused multi-step decode (one pallas_call for the whole sequence) ---
    tokens = jax.random.randint(kt, (T,), 0, VOCAB, jnp.int32)
    decode = make_attn_decoder_seq(prepped, T)
    s_logp, s_hid, s_att = decode(tokens, hidden, encoder_outputs)
    jax.block_until_ready((s_logp, s_hid, s_att))

    rs_logp, rs_hid, rs_att = reference_decode_seq(params, tokens, hidden, encoder_outputs)
    assert jnp.allclose(s_logp, rs_logp, atol=5e-3, rtol=5e-3)
    assert jnp.allclose(s_hid, rs_hid, atol=5e-3, rtol=5e-3)
    assert jnp.allclose(s_att, rs_att, atol=5e-3, rtol=5e-3)

    print("KERNEL_OK")
</pallas_src>

<mosaic_0001>
module attributes {stable_mosaic.version = 11 : i64} {
  func.func @kernel(%arg0: i32, %arg1: memref<1xi32, #tpu.memory_space<smem>>, %arg2: memref<1x32xf32, #tpu.memory_space<vmem>>, %arg3: memref<1x1x32xf32, #tpu.memory_space<vmem>>, %arg4: memref<128x32xf32, #tpu.memory_space<vmem>>, %arg5: memref<32x128xf32, #tpu.memory_space<vmem>>, %arg6: memref<32x128xf32, #tpu.memory_space<vmem>>, %arg7: memref<32x128xf32, #tpu.memory_space<vmem>>, %arg8: memref<32x32xf32, #tpu.memory_space<vmem>>, %arg9: memref<32x128xf32, #tpu.memory_space<vmem>>, %arg10: memref<8x128xf32, #tpu.memory_space<vmem>>, %arg11: memref<1x8x128xf32, #tpu.memory_space<vmem>>, %arg12: memref<1x32xf32, #tpu.memory_space<vmem>>) attributes {dimension_semantics = [#tpu.dimension_semantics<arbitrary>], iteration_bounds = array<i64: 1>, scalar_prefetch = 1 : i64, scratch_operands = 1 : i64, tpu.core_type = #tpu.core_type<tc>, window_params = [{pipeline_mode = #tpu.pipeline_mode<synchronous>, transform_indices = @transform_0, window_bounds = array<i64: 1, 32>}, {transform_indices = @transform_1, window_bounds = array<i64: 1, 1, 32>}, {pipeline_mode = #tpu.pipeline_mode<synchronous>, transform_indices = @transform_2, window_bounds = array<i64: 128, 32>}, {pipeline_mode = #tpu.pipeline_mode<synchronous>, transform_indices = @transform_3, window_bounds = array<i64: 32, 128>}, {pipeline_mode = #tpu.pipeline_mode<synchronous>, transform_indices = @transform_4, window_bounds = array<i64: 32, 128>}, {pipeline_mode = #tpu.pipeline_mode<synchronous>, transform_indices = @transform_5, window_bounds = array<i64: 32, 128>}, {pipeline_mode = #tpu.pipeline_mode<synchronous>, transform_indices = @transform_6, window_bounds = array<i64: 32, 32>}, {pipeline_mode = #tpu.pipeline_mode<synchronous>, transform_indices = @transform_7, window_bounds = array<i64: 32, 128>}, {pipeline_mode = #tpu.pipeline_mode<synchronous>, transform_indices = @transform_8, window_bounds = array<i64: 8, 128>}, {transform_indices = @transform_9, window_bounds = array<i64: 1, 8, 128>}]} {
    %c0_i32 = arith.constant 0 : i32
    %0 = arith.cmpi eq, %arg0, %c0_i32 : i32
    %1 = arith.extui %0 : i1 to i32
    %c0_i32_0 = arith.constant 0 : i32
    %2 = arith.cmpi ne, %1, %c0_i32_0 : i32
    scf.if %2 {
      %c0_41 = arith.constant 0 : index
      %c0_42 = arith.constant 0 : index
      %97 = vector.load %arg2[%c0_41, %c0_42] : memref<1x32xf32, #tpu.memory_space<vmem>>, vector<1x32xf32>
      %c0_43 = arith.constant 0 : index
      %c0_44 = arith.constant 0 : index
      %98 = vector.load %arg12[%c0_43, %c0_44] : memref<1x32xf32, #tpu.memory_space<vmem>>, vector<1x32xf32>
      tpu.vector_store %arg12[%c0_43, %c0_44], %97 {strides = array<i32>} : memref<1x32xf32, #tpu.memory_space<vmem>>, vector<1x32xf32>,
    } else {
    }
    %c0 = arith.constant 0 : index
    %c0_1 = arith.constant 0 : index
    %c0_2 = arith.constant 0 : index
    %3 = vector.load %arg3[%c0, %c0_1, %c0_2] : memref<1x1x32xf32, #tpu.memory_space<vmem>>, vector<1x1x32xf32>
    %4 = vector.shape_cast %3 : vector<1x1x32xf32> to vector<1x32xf32>
    %c0_3 = arith.constant 0 : index
    %c0_4 = arith.constant 0 : index
    %5 = vector.load %arg12[%c0_3, %c0_4] : memref<1x32xf32, #tpu.memory_space<vmem>>, vector<1x32xf32>
    %c0_5 = arith.constant 0 : index
    %c0_6 = arith.constant 0 : index
    %6 = vector.load %arg4[%c0_5, %c0_6] : memref<128x32xf32, #tpu.memory_space<vmem>>, vector<128x32xf32>
    %c0_7 = arith.constant 0 : index
    %c0_8 = arith.constant 0 : index
    %7 = vector.load %arg5[%c0_7, %c0_8] : memref<32x128xf32, #tpu.memory_space<vmem>>, vector<32x128xf32>
    %c0_9 = arith.constant 0 : index
    %c0_10 = arith.constant 0 : index
    %8 = vector.load %arg6[%c0_9, %c0_10] : memref<32x128xf32, #tpu.memory_space<vmem>>, vector<32x128xf32>
    %c0_11 = arith.constant 0 : index
    %c0_12 = arith.constant 0 : index
    %9 = vector.load %arg7[%c0_11, %c0_12] : memref<32x128xf32, #tpu.memory_space<vmem>>, vector<32x128xf32>
    %c0_13 = arith.constant 0 : index
    %c0_14 = arith.constant 0 : index
    %10 = vector.load %arg8[%c0_13, %c0_14] : memref<32x32xf32, #tpu.memory_space<vmem>>, vector<32x32xf32>
    %c0_15 = arith.constant 0 : index
    %c0_16 = arith.constant 0 : index
    %11 = vector.load %arg9[%c0_15, %c0_16] : memref<32x128xf32, #tpu.memory_space<vmem>>, vector<32x128xf32>
    %c0_17 = arith.constant 0 : index
    %c0_18 = arith.constant 0 : index
    %12 = vector.load %arg10[%c0_17, %c0_18] : memref<8x128xf32, #tpu.memory_space<vmem>>, vector<8x128xf32>
    %13 = tpu.iota {dimensions = array<i32: 1>} : vector<1x128xi32>
    %cst = arith.constant dense<0.000000e+00> : vector<1x128xf32>
    %14 = tpu.matmul %4, %7, %cst {dimension_numbers = #tpu.dot_dimension_numbers<[1], [0], [0], [1], [0, 0, 1, 1], [], []>} : vector<1x32xf32>, vector<32x128xf32>, vector<1x128xf32> -> vector<1x128xf32>
    %15 = vector.extract_strided_slice %12 {offsets = [0, 0], sizes = [1, 128], strides = [1, 1]} : vector<8x128xf32> to vector<1x128xf32>
    %16 = arith.addf %14, %15 : vector<1x128xf32>
    %cst_19 = arith.constant dense<0.000000e+00> : vector<1x128xf32>
    %17 = tpu.matmul %5, %8, %cst_19 {dimension_numbers = #tpu.dot_dimension_numbers<[1], [0], [0], [1], [0, 0, 1, 1], [], []>} : vector<1x32xf32>, vector<32x128xf32>, vector<1x128xf32> -> vector<1x128xf32>
    %18 = vector.extract_strided_slice %12 {offsets = [1, 0], sizes = [1, 128], strides = [1, 1]} : vector<8x128xf32> to vector<1x128xf32>
    %19 = arith.addf %17, %18 : vector<1x128xf32>
    %c20_i32 = arith.constant 20 : i32
    %20 = vector.broadcast %c20_i32 : i32 to vector<1x128xi32>
    %21 = arith.cmpi slt, %13, %20 : vector<1x128xi32>
    %22 = arith.addf %16, %19 : vector<1x128xf32>
    %cst_20 = arith.constant -1.000000e+30 : f32
    %23 = vector.broadcast %cst_20 : f32 to vector<1x128xf32>
    %24 = arith.select %21, %22, %23 : vector<1x128xi1>, vector<1x128xf32>
    %cst_21 = arith.constant dense<0xFF800000> : vector<1xf32>
    %25 = vector.multi_reduction <maximumf>, %24, %cst_21 [1] : vector<1x128xf32> to vector<1xf32>
    %26 = vector.shape_cast %25 : vector<1xf32> to vector<1x1xf32>
    %27 = vector.broadcast %26 : vector<1x1xf32> to vector<1x128xf32>
    %28 = arith.subf %24, %27 : vector<1x128xf32>
    %29 = math.exp %28 : vector<1x128xf32>
    %cst_22 = arith.constant dense<0.000000e+00> : vector<1xf32>
    %30 = vector.multi_reduction <add>, %29, %cst_22 [1] : vector<1x128xf32> to vector<1xf32>
    %31 = vector.shape_cast %30 : vector<1xf32> to vector<1x1xf32>
    %32 = tpu.reciprocal %31 {approx = true} : vector<1x1xf32> -> vector<1x1xf32>
    %33 = vector.broadcast %32 : vector<1x1xf32> to vector<1x128xf32>
    %34 = arith.mulf %29, %33 : vector<1x128xf32>
    %cst_23 = arith.constant dense<0.000000e+00> : vector<1x32xf32>
    %35 = tpu.matmul %34, %6, %cst_23 {dimension_numbers = #tpu.dot_dimension_numbers<[1], [0], [0], [1], [0, 0, 1, 1], [], []>} : vector<1x128xf32>, vector<128x32xf32>, vector<1x32xf32> -> vector<1x32xf32>
    %36 = vector.extract_strided_slice %16 {offsets = [0, 24], sizes = [1, 32], strides = [1, 1]} : vector<1x128xf32> to vector<1x32xf32>
    %cst_24 = arith.constant dense<0.000000e+00> : vector<1x32xf32>
    %37 = tpu.matmul %35, %10, %cst_24 {dimension_numbers = #tpu.dot_dimension_numbers<[1], [0], [0], [1], [0, 0, 1, 1], [], []>} : vector<1x32xf32>, vector<32x32xf32>, vector<1x32xf32> -> vector<1x32xf32>
    %38 = arith.addf %36, %37 : vector<1x32xf32>
    %cst_25 = arith.constant 0.000000e+00 : f32
    %39 = vector.broadcast %cst_25 : f32 to vector<1x32xf32>
    %40 = arith.maximumf %38, %39 : vector<1x32xf32>
    %cst_26 = arith.constant dense<0.000000e+00> : vector<1x128xf32>
    %41 = tpu.matmul %40, %9, %cst_26 {dimension_numbers = #tpu.dot_dimension_numbers<[1], [0], [0], [1], [0, 0, 1, 1], [], []>} : vector<1x32xf32>, vector<32x128xf32>, vector<1x128xf32> -> vector<1x128xf32>
    %42 = vector.extract_strided_slice %12 {offsets = [2, 0], sizes = [1, 128], strides = [1, 1]} : vector<8x128xf32> to vector<1x128xf32>
    %43 = arith.addf %41, %42 : vector<1x128xf32>
    %44 = vector.extract_strided_slice %43 {offsets = [0, 0], sizes = [1, 32], strides = [1, 1]} : vector<1x128xf32> to vector<1x32xf32>
    %45 = vector.extract_strided_slice %43 {offsets = [0, 32], sizes = [1, 32], strides = [1, 1]} : vector<1x128xf32> to vector<1x32xf32>
    %46 = vector.extract_strided_slice %43 {offsets = [0, 64], sizes = [1, 32], strides = [1, 1]} : vector<1x128xf32> to vector<1x32xf32>
    %47 = vector.extract_strided_slice %19 {offsets = [0, 24], sizes = [1, 32], strides = [1, 1]} : vector<1x128xf32> to vector<1x32xf32>
    %48 = vector.extract_strided_slice %19 {offsets = [0, 56], sizes = [1, 32], strides = [1, 1]} : vector<1x128xf32> to vector<1x32xf32>
    %49 = vector.extract_strided_slice %19 {offsets = [0, 88], sizes = [1, 32], strides = [1, 1]} : vector<1x128xf32> to vector<1x32xf32>
    %50 = arith.addf %44, %47 : vector<1x32xf32>
    %51 = arith.negf %50 : vector<1x32xf32>
    %52 = math.exp %51 : vector<1x32xf32>
    %cst_27 = arith.constant 1.000000e+00 : f32
    %53 = vector.broadcast %cst_27 : f32 to vector<1x32xf32>
    %54 = arith.addf %53, %52 : vector<1x32xf32>
    %55 = arith.divf %53, %54 : vector<1x32xf32>
    %56 = arith.addf %45, %48 : vector<1x32xf32>
    %57 = arith.negf %56 : vector<1x32xf32>
    %58 = math.exp %57 : vector<1x32xf32>
    %cst_28 = arith.constant 1.000000e+00 : f32
    %59 = vector.broadcast %cst_28 : f32 to vector<1x32xf32>
    %60 = arith.addf %59, %58 : vector<1x32xf32>
    %61 = arith.divf %59, %60 : vector<1x32xf32>
    %62 = arith.mulf %55, %49 : vector<1x32xf32>
    %63 = arith.addf %46, %62 : vector<1x32xf32>
    %64 = math.tanh %63 : vector<1x32xf32>
    %cst_29 = arith.constant 1.000000e+00 : f32
    %65 = vector.broadcast %cst_29 : f32 to vector<1x32xf32>
    %66 = arith.subf %65, %61 : vector<1x32xf32>
    %67 = arith.mulf %66, %64 : vector<1x32xf32>
    %68 = arith.mulf %61, %5 : vector<1x32xf32>
    %69 = arith.addf %67, %68 : vector<1x32xf32>
    %cst_30 = arith.constant dense<0.000000e+00> : vector<1x128xf32>
    %70 = tpu.matmul %69, %11, %cst_30 {dimension_numbers = #tpu.dot_dimension_numbers<[1], [0], [0], [1], [0, 0, 1, 1], [], []>} : vector<1x32xf32>, vector<32x128xf32>, vector<1x128xf32> -> vector<1x128xf32>
    %71 = vector.extract_strided_slice %12 {offsets = [3, 0], sizes = [1, 128], strides = [1, 1]} : vector<8x128xf32> to vector<1x128xf32>
    %72 = arith.addf %70, %71 : vector<1x128xf32>
    %c48_i32 = arith.constant 48 : i32
    %73 = vector.broadcast %c48_i32 : i32 to vector<1x128xi32>
    %74 = arith.cmpi slt, %13, %73 : vector<1x128xi32>
    %cst_31 = arith.constant -1.000000e+30 : f32
    %75 = vector.broadcast %cst_31 : f32 to vector<1x128xf32>
    %76 = arith.select %74, %72, %75 : vector<1x128xi1>, vector<1x128xf32>
    %cst_32 = arith.constant dense<0xFF800000> : vector<1xf32>
    %77 = vector.multi_reduction <maximumf>, %76, %cst_32 [1] : vector<1x128xf32> to vector<1xf32>
    %78 = vector.shape_cast %77 : vector<1xf32> to vector<1x1xf32>
    %79 = vector.broadcast %78 : vector<1x1xf32> to vector<1x128xf32>
    %80 = arith.subf %76, %79 : vector<1x128xf32>
    %81 = vector.broadcast %78 : vector<1x1xf32> to vector<1x128xf32>
    %82 = arith.subf %76, %81 : vector<1x128xf32>
    %83 = math.exp %82 : vector<1x128xf32>
    %cst_33 = arith.constant dense<0.000000e+00> : vector<1xf32>
    %84 = vector.multi_reduction <add>, %83, %cst_33 [1] : vector<1x128xf32> to vector<1xf32>
    %85 = vector.shape_cast %84 : vector<1xf32> to vector<1x1xf32>
    %86 = math.log %85 : vector<1x1xf32>
    %87 = vector.broadcast %86 : vector<1x1xf32> to vector<1x128xf32>
    %88 = arith.subf %80, %87 : vector<1x128xf32>
    %c0_34 = arith.constant 0 : index
    %c0_35 = arith.constant 0 : index
    %89 = vector.load %arg12[%c0_34, %c0_35] : memref<1x32xf32, #tpu.memory_space<vmem>>, vector<1x32xf32>
    tpu.vector_store %arg12[%c0_34, %c0_35], %69 {strides = array<i32>} : memref<1x32xf32, #tpu.memory_space<vmem>>, vector<1x32xf32>,
    %cst_36 = arith.constant 0.000000e+00 : f32
    %90 = vector.broadcast %cst_36 : f32 to vector<1x96xf32>
    %91 = tpu.concatenate %69, %90 in 1 : vector<1x32xf32>, vector<1x96xf32> -> vector<1x128xf32>
    %cst_37 = arith.constant 0.000000e+00 : f32
    %92 = vector.broadcast %cst_37 : f32 to vector<5x128xf32>
    %93 = tpu.concatenate %88, %91, %34, %92 in 0 : vector<1x128xf32>, vector<1x128xf32>, vector<1x128xf32>, vector<5x128xf32> -> vector<8x128xf32>
    %c0_38 = arith.constant 0 : index
    %c0_39 = arith.constant 0 : index
    %c0_40 = arith.constant 0 : index
    %94 = vector.load %arg11[%c0_38, %c0_39, %c0_40] : memref<1x8x128xf32, #tpu.memory_space<vmem>>, vector<1x8x128xf32>
    %95 = vector.shape_cast %94 : vector<1x8x128xf32> to vector<8x128xf32>
    %96 = vector.shape_cast %93 : vector<8x128xf32> to vector<1x8x128xf32>
    tpu.vector_store %arg11[%c0_38, %c0_39, %c0_40], %96 {strides = array<i32>} : memref<1x8x128xf32, #tpu.memory_space<vmem>>, vector<1x8x128xf32>,
    return
  }
  func.func @transform_0(%arg0: i32, %arg1: memref<1xi32, #tpu.memory_space<smem>>) -> (i32, i32) {
    %c0_i32 = arith.constant 0 : i32
    %c0_i32_0 = arith.constant 0 : i32
    %c0_i32_1 = arith.constant 0 : i32
    return %c0_i32, %c0_i32_0 : i32, i32
  }
  func.func @transform_1(%arg0: i32, %arg1: memref<1xi32, #tpu.memory_space<smem>>) -> (i32, i32, i32) {
    %0 = arith.index_cast %arg0 : i32 to index
    %1 = memref.load %arg1[%0] : memref<1xi32, #tpu.memory_space<smem>>
    %c0_i32 = arith.constant 0 : i32
    %c0_i32_0 = arith.constant 0 : i32
    %c0_i32_1 = arith.constant 0 : i32
    return %1, %c0_i32, %c0_i32_0 : i32, i32, i32
  }
  func.func @transform_2(%arg0: i32, %arg1: memref<1xi32, #tpu.memory_space<smem>>) -> (i32, i32) {
    %c0_i32 = arith.constant 0 : i32
    %c0_i32_0 = arith.constant 0 : i32
    %c0_i32_1 = arith.constant 0 : i32
    return %c0_i32, %c0_i32_0 : i32, i32
  }
  func.func @transform_3(%arg0: i32, %arg1: memref<1xi32, #tpu.memory_space<smem>>) -> (i32, i32) {
    %c0_i32 = arith.constant 0 : i32
    %c0_i32_0 = arith.constant 0 : i32
    %c0_i32_1 = arith.constant 0 : i32
    return %c0_i32, %c0_i32_0 : i32, i32
  }
  func.func @transform_4(%arg0: i32, %arg1: memref<1xi32, #tpu.memory_space<smem>>) -> (i32, i32) {
    %c0_i32 = arith.constant 0 : i32
    %c0_i32_0 = arith.constant 0 : i32
    %c0_i32_1 = arith.constant 0 : i32
    return %c0_i32, %c0_i32_0 : i32, i32
  }
  func.func @transform_5(%arg0: i32, %arg1: memref<1xi32, #tpu.memory_space<smem>>) -> (i32, i32) {
    %c0_i32 = arith.constant 0 : i32
    %c0_i32_0 = arith.constant 0 : i32
    %c0_i32_1 = arith.constant 0 : i32
    return %c0_i32, %c0_i32_0 : i32, i32
  }
  func.func @transform_6(%arg0: i32, %arg1: memref<1xi32, #tpu.memory_space<smem>>) -> (i32, i32) {
    %c0_i32 = arith.constant 0 : i32
    %c0_i32_0 = arith.constant 0 : i32
    %c0_i32_1 = arith.constant 0 : i32
    return %c0_i32, %c0_i32_0 : i32, i32
  }
  func.func @transform_7(%arg0: i32, %arg1: memref<1xi32, #tpu.memory_space<smem>>) -> (i32, i32) {
    %c0_i32 = arith.constant 0 : i32
    %c0_i32_0 = arith.constant 0 : i32
    %c0_i32_1 = arith.constant 0 : i32
    return %c0_i32, %c0_i32_0 : i32, i32
  }
  func.func @transform_8(%arg0: i32, %arg1: memref<1xi32, #tpu.memory_space<smem>>) -> (i32, i32) {
    %c0_i32 = arith.constant 0 : i32
    %c0_i32_0 = arith.constant 0 : i32
    %c0_i32_1 = arith.constant 0 : i32
    return %c0_i32, %c0_i32_0 : i32, i32
  }
  func.func @transform_9(%arg0: i32, %arg1: memref<1xi32, #tpu.memory_space<smem>>) -> (i32, i32, i32) {
    %c0_i32 = arith.constant 0 : i32
    %c0_i32_0 = arith.constant 0 : i32
    %c0_i32_1 = arith.constant 0 : i32
    return %arg0, %c0_i32, %c0_i32_0 : i32, i32, i32
  }
}

</mosaic_0001>

<llo_original>
// kernel: forward.1
$region0: #{forward.1}
  #allocation0 [shape = 'u32[]', space=smem, size = 0x4, offset = 0x4, fixed_abs, tag = 'smem constant byte address 0x4 - core index']
  #allocation1 [shape = 'u32[72,128]{1,0:T(1,128)}', space=vmem, size = 0x9000, scoped, tag = 'internal scratch']
  #allocation2 [shape = 'f32[1,32]{1,0:T(1,128)}', space=vmem, size = 0x200, scoped, tag = 'scratch operand']
  #allocation3 [shape = 's32[1]{0}', space=sflag, size = 0x4, scoped, tag = 'scoped memory for forward.1']
  #allocation4 [shape = 's32[1]{0:T(128)S(6)}', space=smem, size = 0x200, scoped, tag = 'prefetched SMEM operand 0']
  %s0 = inlined_call_operand.<no memory space> [shape: s32[1], index: 0, kind: input, shape index: {}]
  %s1 = inlined_call_operand.vmem [shape: f32[1,32], index: 1, kind: input, shape index: {}]
  %s2 = inlined_call_operand.vmem [shape: f32[48,1,32], index: 2, kind: input, shape index: {}]
  %s3 = inlined_call_operand.vmem [shape: f32[128,32], index: 3, kind: input, shape index: {}]
  %s4 = inlined_call_operand.hbm [shape: f32[32,128], index: 4, kind: input, shape index: {}]
  %s5 = inlined_call_operand.hbm [shape: f32[32,128], index: 5, kind: input, shape index: {}]
  %s6 = inlined_call_operand.vmem [shape: f32[32,128], index: 6, kind: input, shape index: {}]
  %s7 = inlined_call_operand.vmem [shape: f32[32,32], index: 7, kind: input, shape index: {}]
  %s8 = inlined_call_operand.vmem [shape: f32[32,128], index: 8, kind: input, shape index: {}]
  %s9 = inlined_call_operand.vmem [shape: f32[8,128], index: 9, kind: input, shape index: {}]
  %s10 = inlined_call_operand.vmem [shape: f32[1,8,128], index: 10, kind: output, shape index: {}]
  %s11 = sld [smem:[#allocation0]]
  $region58: #{forward.1} parent=0
    _
  %s13 = ssub.s32 1, %s11
  %s14 = scalar_select 0, %s13, %s11
  %15 = sst [smem:[#allocation4]] %s0
  $region1: #{forward.1} parent=0
    #allocation5 [shape = 'u8[16384]{0}', space=vmem, size = 0x4000, scoped, tag = 'input window, operand 4, single buffered']
    #allocation6 [shape = 's32[1]{0}', space=sflag, size = 0x4, scoped, tag = 'scoped memory for forward.1']
    #allocation7 [shape = 'u8[16384]{0}', space=vmem, size = 0x4000, scoped, tag = 'input window, operand 5, single buffered']
    #allocation8 [shape = 's32[1]{0}', space=sflag, size = 0x4, scoped, tag = 'scoped memory for forward.1']
    %16 = vsyncpa [#allocation6], 0
    %17 = vsyncpa [#allocation8], 0
    // Predicated region
    $region2: #{forward.1} parent=1 // pred_check
      _
    $region3: #{forward.1} parent=1 // pred_check_branch
      %19 = sbr.rel (0) target = $region5
    $region4: #{forward.1} parent=1 // pred_region
      _
    $region5: #{forward.1} parent=1 // pred_fallthru
      _
    // Predicated region
    $region6: #{forward.1} parent=1 // pred_check
      _
    $region7: #{forward.1} parent=1 // pred_check_branch
      %21 = sbr.rel (0) target = $region9
    $region8: #{forward.1} parent=1 // pred_region
      %s22 = sld [smem:[#allocation4]]
      %p23 = scmp.lt.s32.totalorder %s22, 47
      %s24 = scalar_select %p23, %s22, 47
      %s25 = scalar_lea.vmem %s2, %s24
      %s26 = sld [smem:[#allocation4]]
    $region9: #{forward.1} parent=1 // pred_fallthru
      _
    // Predicated region
    $region10: #{forward.1} parent=1 // pred_check
      _
    $region11: #{forward.1} parent=1 // pred_check_branch
      %28 = sbr.rel (0) target = $region13
    $region12: #{forward.1} parent=1 // pred_region
      _
    $region13: #{forward.1} parent=1 // pred_fallthru
      _
    // Predicated region
    $region14: #{forward.1} parent=1 // pred_check
      _
    $region15: #{forward.1} parent=1 // pred_check_branch
      %30 = sbr.rel (0) target = $region17
    $region16: #{forward.1} parent=1 // pred_region
      %32 = vsyncadd [#allocation6], 0
      %s33 = sshll.u32 %s4, 4
      %s34 = int_to_ptr.hbm [resolvable:$true] %s33
      %s35 = sshll.u32 [#allocation5], 4
      %s36 = int_to_ptr.vmem [resolvable:$true] %s35
      %41 = dma.hbm_to_vmem [thread:$0]  %s34, 512, %s36, [#allocation6], 128, 128, 8
    $region17: #{forward.1} parent=1 // pred_fallthru
      _
    // Predicated region
    $region18: #{forward.1} parent=1 // pred_check
      _
    $region19: #{forward.1} parent=1 // pred_check_branch
      %43 = sbr.rel (0) target = $region21
    $region20: #{forward.1} parent=1 // pred_region
      %45 = vsyncadd [#allocation8], 0
      %s46 = sshll.u32 %s5, 4
      %s47 = int_to_ptr.hbm [resolvable:$true] %s46
      %s48 = sshll.u32 [#allocation7], 4
      %s49 = int_to_ptr.vmem [resolvable:$true] %s48
      %54 = dma.hbm_to_vmem [thread:$0]  %s47, 512, %s49, [#allocation8], 128, 128, 8
    $region21: #{forward.1} parent=1 // pred_fallthru
      _
    // Predicated region
    $region22: #{forward.1} parent=1 // pred_check
      _
    $region23: #{forward.1} parent=1 // pred_check_branch
      %56 = sbr.rel (0) target = $region25
    $region24: #{forward.1} parent=1 // pred_region
      _
    $region25: #{forward.1} parent=1 // pred_fallthru
      _
    // Predicated region
    $region26: #{forward.1} parent=1 // pred_check
      _
    $region27: #{forward.1} parent=1 // pred_check_branch
      %58 = sbr.rel (0) target = $region29
    $region28: #{forward.1} parent=1 // pred_region
      _
    $region29: #{forward.1} parent=1 // pred_fallthru
      _
    // Predicated region
    $region30: #{forward.1} parent=1 // pred_check
      _
    $region31: #{forward.1} parent=1 // pred_check_branch
      %60 = sbr.rel (0) target = $region33
    $region32: #{forward.1} parent=1 // pred_region
      _
    $region33: #{forward.1} parent=1 // pred_fallthru
      _
    // Predicated region
    $region34: #{forward.1} parent=1 // pred_check
      _
    $region35: #{forward.1} parent=1 // pred_check_branch
      %62 = sbr.rel (0) target = $region37
    $region36: #{forward.1} parent=1 // pred_region
      _
    $region37: #{forward.1} parent=1 // pred_fallthru
      _
    // Predicated region
    $region38: #{forward.1} parent=1 // pred_check
      _
    $region39: #{forward.1} parent=1 // pred_check_branch
      %64 = sbr.rel (0) target = $region41
    $region40: #{forward.1} parent=1 // pred_region
      %66 = dma.done [#allocation6], 512
    $region41: #{forward.1} parent=1 // pred_fallthru
      _
    // Predicated region
    $region42: #{forward.1} parent=1 // pred_check
      _
    $region43: #{forward.1} parent=1 // pred_check_branch
      %68 = sbr.rel (0) target = $region45
    $region44: #{forward.1} parent=1 // pred_region
      %70 = dma.done [#allocation8], 512
    $region45: #{forward.1} parent=1 // pred_fallthru
      _
    %s71 = sld [smem:[#allocation4]]
    %p72 = scmp.lt.s32.totalorder %s71, 47
    %s73 = scalar_select %p72, %s71, 47
    %s74 = scalar_lea.vmem %s2, %s73
    %s75 = sld [smem:[#allocation4]]
    %p76 = scmp.lt.s32.totalorder %s75, 47
    %s77 = scalar_select %p76, %s75, 47
    %s78 = scalar_lea.vmem %s2, %s77
    %s79 = sld [smem:[#allocation4]]
    %p80 = scmp.eq.s32.totalorder 0, 0
    // Predicated region
    $region46: #{forward.1} parent=1 // pred_check
      %p81 = pneg %p80
    $region47: #{forward.1} parent=1 // pred_check_branch
      %83 = sbr.rel (%p81) target = $region49
    $region48: #{forward.1} parent=1 // pred_region
      %v84 = vld [vmem:[%s1] sm:$0x1]
      %vm85 = vcmask 253952
      %86 = vst.msk [vmem:[#allocation2] sm:$0x1] %vm85, %v84
    $region49: #{forward.1} parent=1 // pred_fallthru
      _
    %v87 = vld [vmem:[%s78] sm:$0x1]
    %v88 = vld [vmem:[#allocation2] sm:$0x1]
    %v89 = vld [vmem:[%s3] sm:$0xff]
    %v90 = vld [vmem:[%s3 + $0x8] sm:$0xff]
    %v91 = vld [vmem:[%s3 + $0x10] sm:$0xff]
    %v92 = vld [vmem:[%s3 + $0x18] sm:$0xff]
    %v93 = vld [vmem:[%s3 + $0x20] sm:$0xff]
    %v94 = vld [vmem:[%s3 + $0x28] sm:$0xff]
    %v95 = vld [vmem:[%s3 + $0x30] sm:$0xff]
    %v96 = vld [vmem:[%s3 + $0x38] sm:$0xff]
    %v97 = vld [vmem:[%s3 + $0x40] sm:$0xff]
    %v98 = vld [vmem:[%s3 + $0x48] sm:$0xff]
    %v99 = vld [vmem:[%s3 + $0x50] sm:$0xff]
    %v100 = vld [vmem:[%s3 + $0x58] sm:$0xff]
    %v101 = vld [vmem:[%s3 + $0x60] sm:$0xff]
    %v102 = vld [vmem:[%s3 + $0x68] sm:$0xff]
    %v103 = vld [vmem:[%s3 + $0x70] sm:$0xff]
    %v104 = vld [vmem:[%s3 + $0x78] sm:$0xff]
    %v105 = vld [vmem:[#allocation5] sm:$0xff]
    %v106 = vld [vmem:[#allocation5 + $0x8] sm:$0xff]
    %v107 = vld [vmem:[#allocation5 + $0x10] sm:$0xff]
    %v108 = vld [vmem:[#allocation5 + $0x18] sm:$0xff]
    %v109 = vld [vmem:[#allocation7] sm:$0xff]
    %v110 = vld [vmem:[#allocation7 + $0x8] sm:$0xff]
    %v111 = vld [vmem:[#allocation7 + $0x10] sm:$0xff]
    %v112 = vld [vmem:[#allocation7 + $0x18] sm:$0xff]
    %v113 = vld [vmem:[%s6] sm:$0xff]
    %v114 = vld [vmem:[%s6 + $0x8] sm:$0xff]
    %v115 = vld [vmem:[%s6 + $0x10] sm:$0xff]
    %v116 = vld [vmem:[%s6 + $0x18] sm:$0xff]
    %v117 = vld [vmem:[%s7] sm:$0xff]
    %v118 = vld [vmem:[%s7 + $0x8] sm:$0xff]
    %v119 = vld [vmem:[%s7 + $0x10] sm:$0xff]
    %v120 = vld [vmem:[%s7 + $0x18] sm:$0xff]
    %v121 = vld [vmem:[%s8] sm:$0xff]
    %v122 = vld [vmem:[%s8 + $0x8] sm:$0xff]
    %v123 = vld [vmem:[%s8 + $0x10] sm:$0xff]
    %v124 = vld [vmem:[%s8 + $0x18] sm:$0xff]
    %v125 = vld [vmem:[%s9] sm:$0xff]
    %v126 = vlaneseq
    %v127 = vand.u32 %v126, 127
    %vm128 = vcmask 261120
    %v130 = vsel %vm128, %v87, 0
    %132 = vmatpush.msra.mxu0 0.0
    %133 = vmatpush.msra.mxu0 0.0
    %134 = vmatpush.msra.mxu0 0.0
    %135 = vmatpush.msra.mxu0 0.0
    %136 = vmatpush.msra.mxu0 0.0
    %137 = vmatpush.msra.mxu0 0.0
    %138 = vmatpush.msra.mxu0 0.0
    %139 = vmatpush.msra.mxu0 0.0
    %140 = vmatpush.msra.mxu0 0.0
    %141 = vmatpush.msra.mxu0 0.0
    %142 = vmatpush.msra.mxu0 0.0
    %143 = vmatpush.msra.mxu0 0.0
    %144 = vmatpush.msra.mxu0 %v108
    %145 = vmatpush.msra.mxu0 %v107
    %146 = vmatpush.msra.mxu0 %v106
    %147 = vmatpush.msra.mxu0 %v105
    %148 = vmatmul.f32.gmra.mxu0 %v130
    %v149 = vpop.f32.mrf.mxu0
    %v150 = vadd.f32 %v125, %v149
    %151 = vdwg.mxu0
    %v153 = vrot.slane %v125, 1
    %v156 = vsel %vm128, %v88, 0
    %158 = vmatpush.msra.mxu0 0.0
    %159 = vmatpush.msra.mxu0 0.0
    %160 = vmatpush.msra.mxu0 0.0
    %161 = vmatpush.msra.mxu0 0.0
    %162 = vmatpush.msra.mxu0 0.0
    %163 = vmatpush.msra.mxu0 0.0
    %164 = vmatpush.msra.mxu0 0.0
    %165 = vmatpush.msra.mxu0 0.0
    %166 = vmatpush.msra.mxu0 0.0
    %167 = vmatpush.msra.mxu0 0.0
    %168 = vmatpush.msra.mxu0 0.0
    %169 = vmatpush.msra.mxu0 0.0
    %170 = vmatpush.msra.mxu0 %v112
    %171 = vmatpush.msra.mxu0 %v111
    %172 = vmatpush.msra.mxu0 %v110
    %173 = vmatpush.msra.mxu0 %v109
    %174 = vmatmul.f32.gmra.mxu0 %v156
    %v175 = vpop.f32.mrf.mxu0
    %v176 = vadd.f32 %v153, %v175
    %177 = vdwg.mxu0
    %vm178 = vcmp.lt.s32.totalorder %v127, 20
    %v179 = vadd.f32 %v150, %v176
    %v180 = vsel %vm178, %v179, -1e+30
    %vm181 = vcmask 1040384
    %v182 = vsel %vm181, %v180, -inf
    %183 = vmax.xlane.f32.xlu0 %v182
    %v184 = vpop.xlane.xlu0 %183
    %v185 = vsub.f32 %v180, %v184
    %v186 = vmul.f32 %v185, 1.442695
    %v187 = vpow.pop %v186
    %v188 = vsel %vm181, %v187, 0.0
    %189 = vadd.xlane.f32.xlu0 %v188
    %v190 = vpop.xlane.xlu0 %189
    %v191 = vrcp.pop %v190
    %v192 = vmul.f32 %v187, %v191
    %193 = vmatpush.msra.mxu0 %v104
    %194 = vmatpush.msra.mxu0 %v103
    %195 = vmatpush.msra.mxu0 %v102
    %196 = vmatpush.msra.mxu0 %v101
    %197 = vmatpush.msra.mxu0 %v100
    %198 = vmatpush.msra.mxu0 %v99
    %199 = vmatpush.msra.mxu0 %v98
    %200 = vmatpush.msra.mxu0 %v97
    %201 = vmatpush.msra.mxu0 %v96
    %202 = vmatpush.msra.mxu0 %v95
    %203 = vmatpush.msra.mxu0 %v94
    %204 = vmatpush.msra.mxu0 %v93
    %205 = vmatpush.msra.mxu0 %v92
    %206 = vmatpush.msra.mxu0 %v91
    %207 = vmatpush.msra.mxu0 %v90
    %208 = vmatpush.msra.mxu0 %v89
    %209 = vmatmul.f32.gmra.mxu0 %v192
    %v210 = vpop.f32.mrf.mxu0
    %v211 = vadd.f32 0.0, %v210
    %212 = vdwg.mxu0
    %v214 = vsel %vm128, %v211, 0
    %216 = vmatpush.msra.mxu0 0.0
    %217 = vmatpush.msra.mxu0 0.0
    %218 = vmatpush.msra.mxu0 0.0
    %219 = vmatpush.msra.mxu0 0.0
    %220 = vmatpush.msra.mxu0 0.0
    %221 = vmatpush.msra.mxu0 0.0
    %222 = vmatpush.msra.mxu0 0.0
    %223 = vmatpush.msra.mxu0 0.0
    %224 = vmatpush.msra.mxu0 0.0
    %225 = vmatpush.msra.mxu0 0.0
    %226 = vmatpush.msra.mxu0 0.0
    %227 = vmatpush.msra.mxu0 0.0
    %228 = vmatpush.msra.mxu0 %v120
    %229 = vmatpush.msra.mxu0 %v119
    %230 = vmatpush.msra.mxu0 %v118
    %231 = vmatpush.msra.mxu0 %v117
    %232 = vmatmul.f32.gmra.mxu0 %v214
    %v233 = vpop.f32.mrf.mxu0
    %v234 = vadd.f32 0.0, %v233
    %235 = vdwg.mxu0
    %237 = vrot.lane.b32.xlu0 %v234, 24
    %v238 = vpop.permute.xlu0 %237
    %v240 = vadd.f32 %v150, %v238
    %v241 = vmax.f32 %v240, 0.0
    %243 = vrot.lane.b32.xlu0 %v241, 104
    %v244 = vpop.permute.xlu0 %243
    %v245 = vrot.slane %v125, 2
    %v247 = vsel %vm128, %v244, 0
    %249 = vmatpush.msra.mxu0 0.0
    %250 = vmatpush.msra.mxu0 0.0
    %251 = vmatpush.msra.mxu0 0.0
    %252 = vmatpush.msra.mxu0 0.0
    %253 = vmatpush.msra.mxu0 0.0
    %254 = vmatpush.msra.mxu0 0.0
    %255 = vmatpush.msra.mxu0 0.0
    %256 = vmatpush.msra.mxu0 0.0
    %257 = vmatpush.msra.mxu0 0.0
    %258 = vmatpush.msra.mxu0 0.0
    %259 = vmatpush.msra.mxu0 0.0
    %260 = vmatpush.msra.mxu0 0.0
    %261 = vmatpush.msra.mxu0 %v116
    %262 = vmatpush.msra.mxu0 %v115
    %263 = vmatpush.msra.mxu0 %v114
    %264 = vmatpush.msra.mxu0 %v113
    %265 = vmatmul.f32.gmra.mxu0 %v247
    %v266 = vpop.f32.mrf.mxu0
    %v267 = vadd.f32 %v245, %v266
    %268 = vdwg.mxu0
    %270 = vrot.lane.b32.xlu0 %v176, 104
    %v271 = vpop.permute.xlu0 %270
    %v273 = vadd.f32 %v267, %v271
    %v274 = vxor.u32 %v273, 2147483648
    %v275 = vmul.f32 %v274, 1.442695
    %v276 = vpow.pop %v275
    %v277 = vadd.f32 %v276, 1.0
    %v278 = vrcp.pop %v277
    %v279 = vmul.f32 %v277, %v278
    %v280 = vsub.f32 1.0, %v279
    %v281 = vmul.f32 %v278, %v280
    %v282 = vadd.f32 %v278, %v281
    %vm283 = vweird.f32 %v277
    %vm284 = vweird.f32 %v278
    %vm285 = vmor %vm283, %vm284
    %v286 = vsel %vm285, %v278, %v282
    %v287 = vand.u32 2147483647, %v277
    %vm288 = vcmp.eq.f32.partialorder %v287, 8.507059e+37
    %v289 = vand.u32 %v277, 2147483648
    %v290 = vor.u32 1.1754944e-38, %v289
    %v291 = vsel %vm288, %v290, %v286
    %v292 = vmul.f32 1.0, %v291
    %293 = vrot.lane.b32.xlu0 %v176, 40
    %v294 = vpop.permute.xlu0 %293
    %v296 = vmul.f32 %v292, %v294
    %298 = vrot.lane.b32.xlu0 %v296, 64
    %v299 = vpop.permute.xlu0 %298
    %v301 = vadd.f32 %v267, %v299
    %v302 = vtanh.pop %v301
    %v303 = vsub.f32 1.0, %v292
    %305 = vrot.lane.b32.xlu0 %v302, 96
    %v306 = vpop.permute.xlu0 %305
    %v308 = vmul.f32 %v303, %v306
    %v309 = vperm.slane %v88, 0
    %310 = vrot.lane.b32.xlu0 %v309, 32
    %v311 = vpop.permute.xlu0 %310
    %v313 = vmul.f32 %v292, %v311
    %v314 = vadd.f32 %v308, %v313
    %316 = vrot.lane.b32.xlu0 %v314, 96
    %v317 = vpop.permute.xlu0 %316
    %v318 = vrot.slane %v125, 3
    %v320 = vsel %vm128, %v317, 0
    %322 = vmatpush.msra.mxu0 0.0
    %323 = vmatpush.msra.mxu0 0.0
    %324 = vmatpush.msra.mxu0 0.0
    %325 = vmatpush.msra.mxu0 0.0
    %326 = vmatpush.msra.mxu0 0.0
    %327 = vmatpush.msra.mxu0 0.0
    %328 = vmatpush.msra.mxu0 0.0
    %329 = vmatpush.msra.mxu0 0.0
    %330 = vmatpush.msra.mxu0 0.0
    %331 = vmatpush.msra.mxu0 0.0
    %332 = vmatpush.msra.mxu0 0.0
    %333 = vmatpush.msra.mxu0 0.0
    %334 = vmatpush.msra.mxu0 %v124
    %335 = vmatpush.msra.mxu0 %v123
    %336 = vmatpush.msra.mxu0 %v122
    %337 = vmatpush.msra.mxu0 %v121
    %338 = vmatmul.f32.gmra.mxu0 %v320
    %v339 = vpop.f32.mrf.mxu0
    %v340 = vadd.f32 %v318, %v339
    %341 = vdwg.mxu0
    %vm342 = vcmp.lt.s32.totalorder %v127, 48
    %v343 = vsel %vm342, %v340, -1e+30
    %v344 = vsel %vm181, %v343, -inf
    %345 = vmax.xlane.f32.xlu0 %v344
    %v346 = vpop.xlane.xlu0 %345
    %v347 = vsub.f32 %v343, %v346
    %v348 = vmul.f32 %v347, 1.442695
    %v349 = vpow.pop %v348
    %v350 = vsel %vm181, %v349, 0.0
    %351 = vadd.xlane.f32.xlu0 %v350
    %v352 = vpop.xlane.xlu0 %351
    %v353 = vlog2.pop %v352
    %v354 = vmul.f32 %v353, 0.6931472
    %v355 = vsub.f32 %v347, %v354
    %vm357 = vcmask 253952
    %358 = vst.msk [vmem:[#allocation2] sm:$0x1] %vm357, %v317
    %v359 = vsel %vm128, %v317, 0.0
    %v361 = vrot.slane %v359, 7
    %v364 = vrot.slane %v192, 6
    %v366 = vsel %vm181, %v355, %v361
    %vm367 = vcmask 1041408
    %v368 = vsel %vm367, %v366, %v364
    %vm369 = vcmask 1042432
    %v370 = vsel %vm369, %v368, 0.0
    %371 = vst [vmem:[%s10] sm:$0xff] %v370
    // Predicated region
    $region50: #{forward.1} parent=1 // pred_check
      _
    $region51: #{forward.1} parent=1 // pred_check_branch
      %373 = sbr.rel (0) target = $region53
    $region52: #{forward.1} parent=1 // pred_region
      _
    $region53: #{forward.1} parent=1 // pred_fallthru
      _
    // Predicated region
    $region54: #{forward.1} parent=1 // pred_check
      _
    $region55: #{forward.1} parent=1 // pred_check_branch
      %375 = sbr.rel (0) target = $region57
    $region56: #{forward.1} parent=1 // pred_region
      _
    $region57: #{forward.1} parent=1 // pred_fallthru
      _
    %376 = vsyncpa [#allocation6], 1
    %377 = vsyncpa [#allocation8], 1

</llo_original>
